<compile_context>
chip_gen: v6e
topology: v6e:2x2x1
jax: 0.10.0
libtpu: 0.0.40
codegen_flags: <defaults>
</compile_context>

<pallas_src>
import jax
import jax.numpy as jnp
from jax.experimental import pallas as pl
from jax.experimental.pallas import tpu as pltpu

# Rows of x / out processed per grid step. 8192 rows (bf16 x + f32 out, double
# buffered) is ~2.5 MiB of VMEM: safe on v7x's 64 MiB; v5e/v6e could push larger.
MAX_TILE = 8192


# ------------------------------ Pallas kernel ------------------------------

def _leaky_relu(x, slope):
    return jnp.where(x >= 0, x, slope * x)


def emlg_kernel(x_ref, wh_ref, b1_ref, w2_ref, b2_ref, w3_ref, b3_ref, o_ref):
    # Fully fused MLP on one row-tile of x: three MXU matmuls with f32
    # accumulation, f32 VPU leaky-relu epilogues. bf16 operands for the MXU.
    h = jnp.dot(x_ref[...], wh_ref[...], preferred_element_type=jnp.float32) + b1_ref[...]
    h = _leaky_relu(h, 0.5).astype(jnp.bfloat16)
    h = jnp.dot(h, w2_ref[...], preferred_element_type=jnp.float32) + b2_ref[...]
    h = _leaky_relu(h, 0.5).astype(jnp.bfloat16)
    # natural-width (out_sz) output; masked 8-lane store is fine (HBM-bound)
    o_ref[...] = jnp.dot(h, w3_ref[...], preferred_element_type=jnp.float32) + b3_ref[...]


# ------------------------------ param prep (run ONCE, outside the hot path) ---

def prepare_params(p):
    """Fold the bias-free embedding Linear into map1 and pre-cast/transpose.

      (x @ Wemb^T) @ W1^T + b1  ==  x @ (Wemb^T @ W1^T) + b1
    """
    w_head = jnp.dot(p['wemb'].T, p['w1'].T)                       # (data_num, hidden) f32 fold
    return {
        'w_head': w_head.astype(jnp.bfloat16),                     # (data_num, hidden)
        'b1': p['b1'].reshape(1, -1).astype(jnp.float32),          # (1, hidden)
        'w2': p['w2'].T.astype(jnp.bfloat16),                      # (hidden, hidden)
        'b2': p['b2'].reshape(1, -1).astype(jnp.float32),          # (1, hidden)
        'w3': p['w3'].T.astype(jnp.bfloat16),                      # (hidden, out_sz)
        'b3': p['b3'].reshape(1, -1).astype(jnp.float32),          # (1, out_sz)
    }


# ------------------------------ wrapper ------------------------------

def emlg_forward(x, prep):
    """Pallas implementation of EmbeddingMLG.forward (x: (B, data_num))."""
    B = x.shape[0]
    data_num, hidden = prep['w_head'].shape
    out_sz = prep['w3'].shape[1]

    # Batch tiling: single full-extent block for small B, otherwise TB-row tiles
    # (B padded up to a multiple of TB so every block satisfies the layout rule).
    if B <= MAX_TILE:
        tb, Bp = B, B
    else:
        tb = MAX_TILE
        Bp = pl.cdiv(B, tb) * tb
    if Bp != B:
        # TODO(synk): a masked last tile would avoid this pad/slice for ragged B.
        x = jnp.pad(x, ((0, Bp - B), (0, 0)))

    x = x.astype(jnp.bfloat16)   # halve the streaming bytes; f32 accumulation in-kernel

    weight_bytes = (prep['w_head'].size + prep['w2'].size + prep['w3'].size) * 2 \
                 + (prep['b1'].size + prep['b2'].size + prep['b3'].size) * 4
    flops = 2 * Bp * (data_num * hidden + hidden * hidden + hidden * out_sz)
    bytes_accessed = Bp * data_num * 2 + Bp * out_sz * 4 + weight_bytes

    out = pl.pallas_call(
        emlg_kernel,
        out_shape=jax.ShapeDtypeStruct((Bp, out_sz), jnp.float32),
        grid=(Bp // tb,),
        in_specs=[
            pl.BlockSpec((tb, data_num), lambda i: (i, 0)),        # x: streamed per tile
            pl.BlockSpec((data_num, hidden), lambda i: (0, 0)),    # weights/biases: VMEM resident
            pl.BlockSpec((1, hidden), lambda i: (0, 0)),
            pl.BlockSpec((hidden, hidden), lambda i: (0, 0)),
            pl.BlockSpec((1, hidden), lambda i: (0, 0)),
            pl.BlockSpec((hidden, out_sz), lambda i: (0, 0)),
            pl.BlockSpec((1, out_sz), lambda i: (0, 0)),
        ],
        out_specs=pl.BlockSpec((tb, out_sz), lambda i: (i, 0)),
        compiler_params=pltpu.CompilerParams(
            dimension_semantics=("parallel",)),                    # megacore on v7x
        cost_estimate=pl.CostEstimate(
            flops=flops, transcendentals=0, bytes_accessed=bytes_accessed),
    )(x, prep['w_head'], prep['b1'], prep['w2'], prep['b2'], prep['w3'], prep['b3'])

    return out if Bp == B else out[:B]


# ------------------------------ plain-JAX reference ------------------------------

def emlg_reference(x, p):
    h = x @ p['wemb'].T                                   # embedding (no bias)
    h = h @ p['w1'].T + p['b1']
    h = jnp.where(h >= 0, h, 0.5 * h)                     # leaky_relu(0.5)
    h = h @ p['w2'].T + p['b2']
    h = jnp.where(h >= 0, h, 0.5 * h)
    return h @ p['w3'].T + p['b3']


# ------------------------------ main ------------------------------

if __name__ == "__main__":
    # small shapes consistent with the module constructor
    B, data_num, input_size, hidden_size, output_size = 2, 64, 16, 32, 8

    key = jax.random.PRNGKey(0)
    ks = jax.random.split(key, 9)

    def rnd(k, shape, scale=0.05):
        return scale * jax.random.normal(k, shape, jnp.float32)

    # PyTorch-convention parameter shapes: Linear(in, out) weight is (out, in).
    p = {
        'wemb': rnd(ks[0], (input_size, data_num)),       # embedding.sample_matrix.weight
        'w1':   rnd(ks[1], (hidden_size, input_size)),    # map1.weight
        'b1':   rnd(ks[2], (hidden_size,)),               # map1.bias
        'w2':   rnd(ks[3], (hidden_size, hidden_size)),   # map2.weight
        'b2':   rnd(ks[4], (hidden_size,)),               # map2.bias
        'w3':   rnd(ks[5], (output_size, hidden_size)),   # map3.weight
        'b3':   rnd(ks[6], (output_size,)),               # map3.bias
    }

    x = jax.random.normal(ks[7], (B, data_num), jnp.float32)

    prep = jax.tree_util.tree_map(jax.block_until_ready, prepare_params(p))  # hoisted, once
    fwd = jax.jit(emlg_forward)
    out = jax.block_until_ready(fwd(x, prep))
    ref = jax.block_until_ready(emlg_reference(x, p))

    assert out.shape == (B, output_size), out.shape
    assert bool(jnp.isfinite(out).all())
    err = float(jnp.max(jnp.abs(out - ref)))
    # tolerance loosened for the bf16 operand cast (accumulation stays f32)
    assert err < 2e-2, f"max abs error vs reference: {err}"
    print("KERNEL_OK")
</pallas_src>

<mosaic_0001>
module attributes {stable_mosaic.version = 11 : i64} {
  func.func @emlg_kernel(%arg0: i32, %arg1: memref<2x64xbf16, #tpu.memory_space<vmem>>, %arg2: memref<64x32xbf16, #tpu.memory_space<vmem>>, %arg3: memref<1x32xf32, #tpu.memory_space<vmem>>, %arg4: memref<32x32xbf16, #tpu.memory_space<vmem>>, %arg5: memref<1x32xf32, #tpu.memory_space<vmem>>, %arg6: memref<32x8xbf16, #tpu.memory_space<vmem>>, %arg7: memref<1x8xf32, #tpu.memory_space<vmem>>, %arg8: memref<2x8xf32, #tpu.memory_space<vmem>>) attributes {dimension_semantics = [#tpu.dimension_semantics<parallel>], iteration_bounds = array<i64: 1>, scalar_prefetch = 0 : i64, scratch_operands = 0 : i64, tpu.core_type = #tpu.core_type<tc>, window_params = [{transform_indices = @transform_0, window_bounds = array<i64: 2, 64>}, {pipeline_mode = #tpu.pipeline_mode<synchronous>, transform_indices = @transform_1, window_bounds = array<i64: 64, 32>}, {pipeline_mode = #tpu.pipeline_mode<synchronous>, transform_indices = @transform_2, window_bounds = array<i64: 1, 32>}, {pipeline_mode = #tpu.pipeline_mode<synchronous>, transform_indices = @transform_3, window_bounds = array<i64: 32, 32>}, {pipeline_mode = #tpu.pipeline_mode<synchronous>, transform_indices = @transform_4, window_bounds = array<i64: 1, 32>}, {pipeline_mode = #tpu.pipeline_mode<synchronous>, transform_indices = @transform_5, window_bounds = array<i64: 32, 8>}, {pipeline_mode = #tpu.pipeline_mode<synchronous>, transform_indices = @transform_6, window_bounds = array<i64: 1, 8>}, {transform_indices = @transform_7, window_bounds = array<i64: 2, 8>}]} {
    %c0 = arith.constant 0 : index
    %c0_0 = arith.constant 0 : index
    %0 = vector.load %arg1[%c0, %c0_0] : memref<2x64xbf16, #tpu.memory_space<vmem>>, vector<2x64xbf16>
    %c0_1 = arith.constant 0 : index
    %c0_2 = arith.constant 0 : index
    %1 = vector.load %arg2[%c0_1, %c0_2] : memref<64x32xbf16, #tpu.memory_space<vmem>>, vector<64x32xbf16>
    %cst = arith.constant dense<0.000000e+00> : vector<2x32xf32>
    %2 = tpu.matmul %0, %1, %cst {dimension_numbers = #tpu.dot_dimension_numbers<[1], [0], [0], [1], [0, 0, 1, 1], [], []>} : vector<2x64xbf16>, vector<64x32xbf16>, vector<2x32xf32> -> vector<2x32xf32>
    %c0_3 = arith.constant 0 : index
    %c0_4 = arith.constant 0 : index
    %3 = vector.load %arg3[%c0_3, %c0_4] : memref<1x32xf32, #tpu.memory_space<vmem>>, vector<1x32xf32>
    %4 = vector.broadcast %3 : vector<1x32xf32> to vector<2x32xf32>
    %5 = arith.addf %2, %4 : vector<2x32xf32>
    %cst_5 = arith.constant 0.000000e+00 : f32
    %6 = vector.broadcast %cst_5 : f32 to vector<2x32xf32>
    %7 = arith.cmpf oge, %5, %6 : vector<2x32xf32>
    %cst_6 = arith.constant 5.000000e-01 : f32
    %8 = vector.broadcast %cst_6 : f32 to vector<2x32xf32>
    %9 = arith.mulf %8, %5 : vector<2x32xf32>
    %10 = arith.select %7, %5, %9 : vector<2x32xi1>, vector<2x32xf32>
    %11 = arith.truncf %10 : vector<2x32xf32> to vector<2x32xbf16>
    %c0_7 = arith.constant 0 : index
    %c0_8 = arith.constant 0 : index
    %12 = vector.load %arg4[%c0_7, %c0_8] : memref<32x32xbf16, #tpu.memory_space<vmem>>, vector<32x32xbf16>
    %cst_9 = arith.constant dense<0.000000e+00> : vector<2x32xf32>
    %13 = tpu.matmul %11, %12, %cst_9 {dimension_numbers = #tpu.dot_dimension_numbers<[1], [0], [0], [1], [0, 0, 1, 1], [], []>} : vector<2x32xbf16>, vector<32x32xbf16>, vector<2x32xf32> -> vector<2x32xf32>
    %c0_10 = arith.constant 0 : index
    %c0_11 = arith.constant 0 : index
    %14 = vector.load %arg5[%c0_10, %c0_11] : memref<1x32xf32, #tpu.memory_space<vmem>>, vector<1x32xf32>
    %15 = vector.broadcast %14 : vector<1x32xf32> to vector<2x32xf32>
    %16 = arith.addf %13, %15 : vector<2x32xf32>
    %cst_12 = arith.constant 0.000000e+00 : f32
    %17 = vector.broadcast %cst_12 : f32 to vector<2x32xf32>
    %18 = arith.cmpf oge, %16, %17 : vector<2x32xf32>
    %cst_13 = arith.constant 5.000000e-01 : f32
    %19 = vector.broadcast %cst_13 : f32 to vector<2x32xf32>
    %20 = arith.mulf %19, %16 : vector<2x32xf32>
    %21 = arith.select %18, %16, %20 : vector<2x32xi1>, vector<2x32xf32>
    %22 = arith.truncf %21 : vector<2x32xf32> to vector<2x32xbf16>
    %c0_14 = arith.constant 0 : index
    %c0_15 = arith.constant 0 : index
    %23 = vector.load %arg6[%c0_14, %c0_15] : memref<32x8xbf16, #tpu.memory_space<vmem>>, vector<32x8xbf16>
    %cst_16 = arith.constant dense<0.000000e+00> : vector<2x8xf32>
    %24 = tpu.matmul %22, %23, %cst_16 {dimension_numbers = #tpu.dot_dimension_numbers<[1], [0], [0], [1], [0, 0, 1, 1], [], []>} : vector<2x32xbf16>, vector<32x8xbf16>, vector<2x8xf32> -> vector<2x8xf32>
    %c0_17 = arith.constant 0 : index
    %c0_18 = arith.constant 0 : index
    %25 = vector.load %arg7[%c0_17, %c0_18] : memref<1x8xf32, #tpu.memory_space<vmem>>, vector<1x8xf32>
    %26 = vector.broadcast %25 : vector<1x8xf32> to vector<2x8xf32>
    %27 = arith.addf %24, %26 : vector<2x8xf32>
    %c0_19 = arith.constant 0 : index
    %c0_20 = arith.constant 0 : index
    %28 = vector.load %arg8[%c0_19, %c0_20] : memref<2x8xf32, #tpu.memory_space<vmem>>, vector<2x8xf32>
    tpu.vector_store %arg8[%c0_19, %c0_20], %27 {strides = array<i32>} : memref<2x8xf32, #tpu.memory_space<vmem>>, vector<2x8xf32>,
    return
  }
  func.func @transform_0(%arg0: i32) -> (i32, i32) {
    %c0_i32 = arith.constant 0 : i32
    %c0_i32_0 = arith.constant 0 : i32
    return %arg0, %c0_i32 : i32, i32
  }
  func.func @transform_1(%arg0: i32) -> (i32, i32) {
    %c0_i32 = arith.constant 0 : i32
    %c0_i32_0 = arith.constant 0 : i32
    %c0_i32_1 = arith.constant 0 : i32
    return %c0_i32, %c0_i32_0 : i32, i32
  }
  func.func @transform_2(%arg0: i32) -> (i32, i32) {
    %c0_i32 = arith.constant 0 : i32
    %c0_i32_0 = arith.constant 0 : i32
    %c0_i32_1 = arith.constant 0 : i32
    return %c0_i32, %c0_i32_0 : i32, i32
  }
  func.func @transform_3(%arg0: i32) -> (i32, i32) {
    %c0_i32 = arith.constant 0 : i32
    %c0_i32_0 = arith.constant 0 : i32
    %c0_i32_1 = arith.constant 0 : i32
    return %c0_i32, %c0_i32_0 : i32, i32
  }
  func.func @transform_4(%arg0: i32) -> (i32, i32) {
    %c0_i32 = arith.constant 0 : i32
    %c0_i32_0 = arith.constant 0 : i32
    %c0_i32_1 = arith.constant 0 : i32
    return %c0_i32, %c0_i32_0 : i32, i32
  }
  func.func @transform_5(%arg0: i32) -> (i32, i32) {
    %c0_i32 = arith.constant 0 : i32
    %c0_i32_0 = arith.constant 0 : i32
    %c0_i32_1 = arith.constant 0 : i32
    return %c0_i32, %c0_i32_0 : i32, i32
  }
  func.func @transform_6(%arg0: i32) -> (i32, i32) {
    %c0_i32 = arith.constant 0 : i32
    %c0_i32_0 = arith.constant 0 : i32
    %c0_i32_1 = arith.constant 0 : i32
    return %c0_i32, %c0_i32_0 : i32, i32
  }
  func.func @transform_7(%arg0: i32) -> (i32, i32) {
    %c0_i32 = arith.constant 0 : i32
    %c0_i32_0 = arith.constant 0 : i32
    return %arg0, %c0_i32 : i32, i32
  }
}

</mosaic_0001>

<llo_original>
// kernel: emlg_forward.1
$region0: #{emlg_forward.1}
  #allocation0 [shape = 'u32[]', space=smem, size = 0x4, offset = 0x4, fixed_abs, tag = 'smem constant byte address 0x4 - core index']
  #allocation1 [shape = 'u32[144,128]{1,0:T(1,128)}', space=vmem, size = 0x12000, scoped, tag = 'internal scratch']
  %s0 = inlined_call_operand.vmem [shape: bf16[2,64], index: 0, kind: input, shape index: {}]
  %s1 = inlined_call_operand.vmem [shape: bf16[64,32], index: 1, kind: input, shape index: {}]
  %s2 = inlined_call_operand.vmem [shape: f32[1,32], index: 2, kind: input, shape index: {}]
  %s3 = inlined_call_operand.vmem [shape: bf16[32,32], index: 3, kind: input, shape index: {}]
  %s4 = inlined_call_operand.vmem [shape: f32[1,32], index: 4, kind: input, shape index: {}]
  %s5 = inlined_call_operand.vmem [shape: bf16[32,8], index: 5, kind: input, shape index: {}]
  %s6 = inlined_call_operand.vmem [shape: f32[1,8], index: 6, kind: input, shape index: {}]
  %s7 = inlined_call_operand.hbm [shape: f32[2,8], index: 7, kind: output, shape index: {}]
  %s8 = sld [smem:[#allocation0]]
  $region38: #{emlg_forward.1} parent=0
    _
  %s10 = ssub.s32 1, %s8
  %s11 = scalar_select 0, %s10, %s8
  $region1: #{emlg_forward.1} parent=0
    #allocation2 [shape = 'u8[1024]{0}', space=vmem, size = 0x400, scoped, tag = 'output window, operand 0, single buffered']
    #allocation3 [shape = 's32[1]{0}', space=sflag, size = 0x4, scoped, tag = 'scoped memory for emlg_forward.1']
    %12 = vsyncpa [#allocation3], 0
    // Predicated region
    $region2: #{emlg_forward.1} parent=1 // pred_check
      _
    $region3: #{emlg_forward.1} parent=1 // pred_check_branch
      %14 = sbr.rel (0) target = $region5
    $region4: #{emlg_forward.1} parent=1 // pred_region
      _
    $region5: #{emlg_forward.1} parent=1 // pred_fallthru
      _
    // Predicated region
    $region6: #{emlg_forward.1} parent=1 // pred_check
      _
    $region7: #{emlg_forward.1} parent=1 // pred_check_branch
      %16 = sbr.rel (0) target = $region9
    $region8: #{emlg_forward.1} parent=1 // pred_region
      _
    $region9: #{emlg_forward.1} parent=1 // pred_fallthru
      _
    // Predicated region
    $region10: #{emlg_forward.1} parent=1 // pred_check
      _
    $region11: #{emlg_forward.1} parent=1 // pred_check_branch
      %18 = sbr.rel (0) target = $region13
    $region12: #{emlg_forward.1} parent=1 // pred_region
      _
    $region13: #{emlg_forward.1} parent=1 // pred_fallthru
      _
    // Predicated region
    $region14: #{emlg_forward.1} parent=1 // pred_check
      _
    $region15: #{emlg_forward.1} parent=1 // pred_check_branch
      %20 = sbr.rel (0) target = $region17
    $region16: #{emlg_forward.1} parent=1 // pred_region
      _
    $region17: #{emlg_forward.1} parent=1 // pred_fallthru
      _
    // Predicated region
    $region18: #{emlg_forward.1} parent=1 // pred_check
      _
    $region19: #{emlg_forward.1} parent=1 // pred_check_branch
      %22 = sbr.rel (0) target = $region21
    $region20: #{emlg_forward.1} parent=1 // pred_region
      _
    $region21: #{emlg_forward.1} parent=1 // pred_fallthru
      _
    // Predicated region
    $region22: #{emlg_forward.1} parent=1 // pred_check
      _
    $region23: #{emlg_forward.1} parent=1 // pred_check_branch
      %24 = sbr.rel (0) target = $region25
    $region24: #{emlg_forward.1} parent=1 // pred_region
      _
    $region25: #{emlg_forward.1} parent=1 // pred_fallthru
      _
    // Predicated region
    $region26: #{emlg_forward.1} parent=1 // pred_check
      _
    $region27: #{emlg_forward.1} parent=1 // pred_check_branch
      %26 = sbr.rel (0) target = $region29
    $region28: #{emlg_forward.1} parent=1 // pred_region
      _
    $region29: #{emlg_forward.1} parent=1 // pred_fallthru
      _
    %v28 = vld [vmem:[%s0] sm:$0x1]
    %v29 = vld [vmem:[%s1] sm:$0xf]
    %v30 = vld [vmem:[%s1 + $0x4] sm:$0xf]
    %v31 = vld [vmem:[%s1 + $0x8] sm:$0xf]
    %v32 = vld [vmem:[%s1 + $0xc] sm:$0xf]
    %v33 = vld [vmem:[%s1 + $0x10] sm:$0xf]
    %v34 = vld [vmem:[%s1 + $0x14] sm:$0xf]
    %v35 = vld [vmem:[%s1 + $0x18] sm:$0xf]
    %v36 = vld [vmem:[%s1 + $0x1c] sm:$0xf]
    %v37 = vld [vmem:[%s2] sm:$0x1]
    %v39 = vlaneseq
    %v40 = vshrl.u32 %v39, 7
    %v41 = vsub.s32 0, %v40
    %v42 = vrot.slane %v37, %v41
    %v52 = vunpack.c.l.b16 %v29
    %v53 = vunpack.c.l.b16 %v30
    %v54 = vunpack.c.l.b16 %v31
    %v55 = vunpack.c.l.b16 %v32
    %v56 = vunpack.c.l.b16 %v33
    %v57 = vunpack.c.l.b16 %v34
    %v58 = vunpack.c.l.b16 %v35
    %v59 = vunpack.c.l.b16 %v36
    %v60 = vpack.c.b16 %v53, %v52
    %v61 = vpack.c.b16 %v55, %v54
    %v62 = vpack.c.b16 %v57, %v56
    %v63 = vpack.c.b16 %v59, %v58
    %vm68 = vcmask 523264
    %v70 = vsel %vm68, %v28, 0
    %72 = vmatprep.subr.bf16.mxu0 0
    %73 = vmatpush1.bf16.msra.mxu0 0
    %74 = vmatprep.subr.bf16.mxu0 0
    %75 = vmatpush1.bf16.msra.mxu0 0
    %76 = vmatprep.subr.bf16.mxu0 0
    %77 = vmatpush1.bf16.msra.mxu0 0
    %78 = vmatprep.subr.bf16.mxu0 0
    %79 = vmatpush1.bf16.msra.mxu0 0
    %80 = vmatprep.subr.bf16.mxu0 0
    %81 = vmatpush1.bf16.msra.mxu0 %v63
    %82 = vmatprep.subr.bf16.mxu0 0
    %83 = vmatpush1.bf16.msra.mxu0 %v62
    %84 = vmatprep.subr.bf16.mxu0 0
    %85 = vmatpush1.bf16.msra.mxu0 %v61
    %86 = vmatprep.subr.bf16.mxu0 0
    %87 = vmatpush1.bf16.msra.mxu0 %v60
    %88 = vmatprep.subr.bf16.mxu0 0
    %89 = vmatpush2.bf16.msra.mxu0 0
    %90 = vmatprep.subr.bf16.mxu0 0
    %91 = vmatpush2.bf16.msra.mxu0 0
    %92 = vmatprep.subr.bf16.mxu0 0
    %93 = vmatpush2.bf16.msra.mxu0 0
    %94 = vmatprep.subr.bf16.mxu0 0
    %95 = vmatpush2.bf16.msra.mxu0 0
    %96 = vmatprep.subr.bf16.mxu0 0
    %97 = vmatpush2.bf16.msra.mxu0 0
    %98 = vmatprep.subr.bf16.mxu0 0
    %99 = vmatpush2.bf16.msra.mxu0 0
    %100 = vmatprep.subr.bf16.mxu0 0
    %101 = vmatpush2.bf16.msra.mxu0 0
    %102 = vmatprep.subr.bf16.mxu0 0
    %103 = vmatpush2.bf16.msra.mxu0 0
    %104 = vmatprep.mubr.bf16.mxu0 0
    %105 = vmatmul.mubr.bf16.gmra.mxu0 %v70
    %v106 = vpop.f32.mrf.mxu0
    %v107 = vadd.f32 %v42, %v106
    %v108 = vpop.f32.mrf.mxu0
    %v109 = vpop.f32.mrf.mxu0
    %v110 = vpop.f32.mrf.mxu0
    %111 = vdwg.mxu0
    %vm112 = vcmp.ge.f32.partialorder %v107, 0.0
    %v113 = vmul.f32 %v107, 0.5
    %v114 = vsel %vm112, %v107, %v113
    %v115 = vpack.c.bf16 %v114, %v114
    %v116 = vld [vmem:[%s3] sm:$0xf]
    %v117 = vld [vmem:[%s3 + $0x4] sm:$0xf]
    %v118 = vld [vmem:[%s3 + $0x8] sm:$0xf]
    %v119 = vld [vmem:[%s3 + $0xc] sm:$0xf]
    %v120 = vld [vmem:[%s4] sm:$0x1]
    %v122 = vlaneseq
    %v123 = vshrl.u32 %v122, 7
    %v124 = vsub.s32 0, %v123
    %v125 = vrot.slane %v120, %v124
    %v131 = vunpack.c.l.b16 %v116
    %v132 = vunpack.c.l.b16 %v117
    %v133 = vunpack.c.l.b16 %v118
    %v134 = vunpack.c.l.b16 %v119
    %v135 = vpack.c.b16 %v132, %v131
    %v136 = vpack.c.b16 %v134, %v133
    %vm139 = vcmask 261120
    %v141 = vsel %vm139, %v115, 0
    %143 = vmatprep.subr.bf16.mxu0 0
    %144 = vmatpush1.bf16.msra.mxu0 0
    %145 = vmatprep.subr.bf16.mxu0 0
    %146 = vmatpush1.bf16.msra.mxu0 0
    %147 = vmatprep.subr.bf16.mxu0 0
    %148 = vmatpush1.bf16.msra.mxu0 0
    %149 = vmatprep.subr.bf16.mxu0 0
    %150 = vmatpush1.bf16.msra.mxu0 0
    %151 = vmatprep.subr.bf16.mxu0 0
    %152 = vmatpush1.bf16.msra.mxu0 0
    %153 = vmatprep.subr.bf16.mxu0 0
    %154 = vmatpush1.bf16.msra.mxu0 0
    %155 = vmatprep.subr.bf16.mxu0 0
    %156 = vmatpush1.bf16.msra.mxu0 %v136
    %157 = vmatprep.subr.bf16.mxu0 0
    %158 = vmatpush1.bf16.msra.mxu0 %v135
    %159 = vmatprep.subr.bf16.mxu0 0
    %160 = vmatpush2.bf16.msra.mxu0 0
    %161 = vmatprep.subr.bf16.mxu0 0
    %162 = vmatpush2.bf16.msra.mxu0 0
    %163 = vmatprep.subr.bf16.mxu0 0
    %164 = vmatpush2.bf16.msra.mxu0 0
    %165 = vmatprep.subr.bf16.mxu0 0
    %166 = vmatpush2.bf16.msra.mxu0 0
    %167 = vmatprep.subr.bf16.mxu0 0
    %168 = vmatpush2.bf16.msra.mxu0 0
    %169 = vmatprep.subr.bf16.mxu0 0
    %170 = vmatpush2.bf16.msra.mxu0 0
    %171 = vmatprep.subr.bf16.mxu0 0
    %172 = vmatpush2.bf16.msra.mxu0 0
    %173 = vmatprep.subr.bf16.mxu0 0
    %174 = vmatpush2.bf16.msra.mxu0 0
    %175 = vmatprep.mubr.bf16.mxu0 0
    %176 = vmatmul.mubr.bf16.gmra.mxu0 %v141
    %v177 = vpop.f32.mrf.mxu0
    %v178 = vadd.f32 %v125, %v177
    %v179 = vpop.f32.mrf.mxu0
    %v180 = vpop.f32.mrf.mxu0
    %v181 = vpop.f32.mrf.mxu0
    %182 = vdwg.mxu0
    %vm183 = vcmp.ge.f32.partialorder %v178, 0.0
    %v184 = vmul.f32 %v178, 0.5
    %v185 = vsel %vm183, %v178, %v184
    %v186 = vpack.c.bf16 %v185, %v185
    %v187 = vld [vmem:[%s5] sm:$0xf]
    %v188 = vld [vmem:[%s5 + $0x4] sm:$0xf]
    %v189 = vld [vmem:[%s5 + $0x8] sm:$0xf]
    %v190 = vld [vmem:[%s5 + $0xc] sm:$0xf]
    %v191 = vld [vmem:[%s6] sm:$0x1]
    %v193 = vlaneseq
    %v194 = vshrl.u32 %v193, 7
    %v195 = vsub.s32 0, %v194
    %v196 = vrot.slane %v191, %v195
    %v202 = vunpack.c.l.b16 %v187
    %v203 = vunpack.c.l.b16 %v188
    %v204 = vunpack.c.l.b16 %v189
    %v205 = vunpack.c.l.b16 %v190
    %v206 = vpack.c.b16 %v203, %v202
    %v207 = vpack.c.b16 %v205, %v204
    %v211 = vsel %vm139, %v186, 0
    %213 = vmatprep.subr.bf16.mxu0 0
    %214 = vmatpush1.bf16.msra.mxu0 0
    %215 = vmatprep.subr.bf16.mxu0 0
    %216 = vmatpush1.bf16.msra.mxu0 0
    %217 = vmatprep.subr.bf16.mxu0 0
    %218 = vmatpush1.bf16.msra.mxu0 0
    %219 = vmatprep.subr.bf16.mxu0 0
    %220 = vmatpush1.bf16.msra.mxu0 0
    %221 = vmatprep.subr.bf16.mxu0 0
    %222 = vmatpush1.bf16.msra.mxu0 0
    %223 = vmatprep.subr.bf16.mxu0 0
    %224 = vmatpush1.bf16.msra.mxu0 0
    %225 = vmatprep.subr.bf16.mxu0 0
    %226 = vmatpush1.bf16.msra.mxu0 %v207
    %227 = vmatprep.subr.bf16.mxu0 0
    %228 = vmatpush1.bf16.msra.mxu0 %v206
    %229 = vmatprep.subr.bf16.mxu0 0
    %230 = vmatpush2.bf16.msra.mxu0 0
    %231 = vmatprep.subr.bf16.mxu0 0
    %232 = vmatpush2.bf16.msra.mxu0 0
    %233 = vmatprep.subr.bf16.mxu0 0
    %234 = vmatpush2.bf16.msra.mxu0 0
    %235 = vmatprep.subr.bf16.mxu0 0
    %236 = vmatpush2.bf16.msra.mxu0 0
    %237 = vmatprep.subr.bf16.mxu0 0
    %238 = vmatpush2.bf16.msra.mxu0 0
    %239 = vmatprep.subr.bf16.mxu0 0
    %240 = vmatpush2.bf16.msra.mxu0 0
    %241 = vmatprep.subr.bf16.mxu0 0
    %242 = vmatpush2.bf16.msra.mxu0 0
    %243 = vmatprep.subr.bf16.mxu0 0
    %244 = vmatpush2.bf16.msra.mxu0 0
    %245 = vmatprep.mubr.bf16.mxu0 0
    %246 = vmatmul.mubr.bf16.gmra.mxu0 %v211
    %v247 = vpop.f32.mrf.mxu0
    %v248 = vadd.f32 %v196, %v247
    %v249 = vpop.f32.mrf.mxu0
    %v250 = vpop.f32.mrf.mxu0
    %v251 = vpop.f32.mrf.mxu0
    %252 = vdwg.mxu0
    %vm253 = vcmask 58368
    %254 = vst.msk [vmem:[#allocation2] sm:$0x3] %vm253, %v248
    // Predicated region
    $region30: #{emlg_forward.1} parent=1 // pred_check
      _
    $region31: #{emlg_forward.1} parent=1 // pred_check_branch
      %256 = sbr.rel (0) target = $region33
    $region32: #{emlg_forward.1} parent=1 // pred_region
      %s258 = ssub.s32 32, 32
      %259 = vsyncadd [#allocation3], %s258
      %s261 = sshll.u32 [#allocation2], 4
      %s262 = int_to_ptr.vmem [resolvable:$true] %s261
      %264 = dma.vmem_to_hbm [thread:$0]  %s262, 32, %s7, [#allocation3]
    $region33: #{emlg_forward.1} parent=1 // pred_fallthru
      _
    // Predicated region
    $region34: #{emlg_forward.1} parent=1 // pred_check
      _
    $region35: #{emlg_forward.1} parent=1 // pred_check_branch
      %266 = sbr.rel (0) target = $region37
    $region36: #{emlg_forward.1} parent=1 // pred_region
      %267 = dma.done [#allocation3], 32
    $region37: #{emlg_forward.1} parent=1 // pred_fallthru
      _
    %268 = vsyncpa [#allocation3], 1

</llo_original>
